<compile_context>
chip_gen: v6e
topology: v6e:2x2x1
jax: 0.10.0
libtpu: 0.0.40
codegen_flags: <defaults>
</compile_context>

<pallas_src>
import functools

import jax
import jax.numpy as jnp
from jax import lax
from jax.experimental import pallas as pl
from jax.experimental.pallas import tpu as pltpu


_LANE = 128
# Per-input block budget (~2 MiB).  2 inputs x 2 pipeline buffers x 2 MiB = 8 MiB
# of VMEM, well under the 32 MiB scoped limit, leaving headroom for scratch and
# neighbouring fusions.  (Could sweep pipeline_mode=pl.Buffered(3); default 2
# already hides DMA setup at this block size.)
_BLOCK_BUDGET_BYTES = 2 * 1024 * 1024
_VMEM_LIMIT_BYTES = 32 * 1024 * 1024
_MIN_ROW_TILES = 4  # target >=4 tiles on the "parallel" row axis (v7x megacore)


def _round_up(x: int, m: int) -> int:
    return ((x + m - 1) // m) * m


def _cdiv(a: int, b: int) -> int:
    return (a + b - 1) // b


def _sublane_multiple(itemsize: int) -> int:
    # Packing granularity along sublanes: f32 -> 8, bf16 -> 16, int8/fp8 -> 32.
    return {4: 8, 2: 16, 1: 32}.get(int(itemsize), 8)


def _pick_row_tile(n_rows: int, sub: int, max_rows: int, min_tiles: int) -> int:
    """Row tile: full extent if tiny, else a multiple of `sub` bounded by
    `max_rows`, trying to yield >= `min_tiles` row tiles (megacore + pipelining)."""
    if n_rows <= sub:
        return n_rows                               # full extent: always layout-legal
    cap = max((max_rows // sub) * sub, sub)
    want = max(_round_up(_cdiv(n_rows, min_tiles), sub), sub)
    rt = min(cap, want)
    return n_rows if rt >= n_rows else rt


def _choose_tiles(n_rows: int, hw: int, itemsize: int, block_budget_bytes: int):
    sub = _sublane_multiple(itemsize)
    col_full = _round_up(hw, _LANE)
    elems = max(block_budget_bytes // itemsize, sub * _LANE)  # elems per input block

    rows_fit = elems // col_full
    if rows_fit >= sub:
        # Whole spatial extent in one column tile -> single reduction step per
        # row tile; split rows for megacore / pipeline depth.
        col_tile = hw
        row_tile = _pick_row_tile(n_rows, sub, max_rows=rows_fit,
                                  min_tiles=_MIN_ROW_TILES)
    else:
        # Spatial extent too wide for one block: tile the reduction axis wide,
        # keep a modest (<=32-row) row tile so finalize/writeback steps stay few.
        row_tile = _pick_row_tile(n_rows, sub, max_rows=32, min_tiles=2)
        col_tile = max(((elems // max(row_tile, sub)) // _LANE) * _LANE, _LANE)
        if col_tile >= hw:
            col_tile = hw
    return row_tile, col_tile


def _iou_kernel(pred_ref, gt_ref, out_ref, inter_ref, pg_ref, *,
                eps: float, n_rows: int, hw: int,
                row_tile: int, col_tile: int,
                need_row_mask: bool, need_col_mask: bool,
                compute_f32: bool):
    i = pl.program_id(0)                 # row-tile axis ("parallel")
    j = pl.program_id(1)                 # spatial reduction axis ("arbitrary", last)
    last_i = pl.num_programs(0) - 1
    last_j = pl.num_programs(1) - 1

    @pl.when(j == 0)
    def _():
        inter_ref[...] = jnp.zeros_like(inter_ref)
        pg_ref[...] = jnp.zeros_like(pg_ref)

    def _load():
        p = pred_ref[...]
        g = gt_ref[...]
        if compute_f32:
            p = p.astype(jnp.float32)
            g = g.astype(jnp.float32)
        return p, g

    def _accumulate(p, g):
        # Two lane-axis reductions per tile; accumulation always in f32.
        inter_ref[...] += jnp.sum(p * g, axis=-1, dtype=jnp.float32, keepdims=True)
        pg_ref[...] += jnp.sum(p + g, axis=-1, dtype=jnp.float32, keepdims=True)

    if need_row_mask or need_col_mask:
        # Masking is confined (via pl.when) to the last row/column tile so
        # interior tiles stay on the HBM roofline (matters on v7x).
        conds = []
        if need_row_mask:
            conds.append(i == last_i)
        if need_col_mask:
            conds.append(j == last_j)
        is_edge = conds[0] if len(conds) == 1 else jnp.logical_or(conds[0], conds[1])

        @pl.when(is_edge)
        def _():
            p, g = _load()
            mask = None
            if need_row_mask:
                rid = lax.broadcasted_iota(jnp.int32, p.shape, 0)
                mask = (i * row_tile + rid) < n_rows
            if need_col_mask:
                cid = lax.broadcasted_iota(jnp.int32, p.shape, 1)
                cmask = (j * col_tile + cid) < hw
                mask = cmask if mask is None else jnp.logical_and(mask, cmask)
            # Use where (not multiply-by-mask): padding garbage may be NaN/Inf.
            p = jnp.where(mask, p, jnp.zeros_like(p))
            g = jnp.where(mask, g, jnp.zeros_like(g))
            _accumulate(p, g)

        @pl.when(jnp.logical_not(is_edge))
        def _():
            p, g = _load()
            _accumulate(p, g)
    else:
        p, g = _load()
        _accumulate(p, g)

    # Finalize on the last column tile: per-row IoU loss for this row tile.
    @pl.when(j == last_j)
    def _():
        inter = inter_ref[...]
        union = pg_ref[...] - inter
        loss = 1.0 - (inter + eps) / (union + eps)   # exact divide (no approx recip)
        if need_row_mask:
            # Runs once per row tile (negligible); keeps the epilogue mean exact
            # for any eps, even eps close to 0.
            rid = lax.broadcasted_iota(jnp.int32, loss.shape, 0)
            loss = jnp.where((i * row_tile + rid) < n_rows, loss, 0.0)
        out_ref[...] = loss


def _use_bf16_compute(dtype) -> bool:
    if jnp.dtype(dtype) != jnp.dtype(jnp.bfloat16):
        return False
    try:
        kind = jax.devices()[0].device_kind.lower()
    except Exception:
        return False
    # v5e/v5p VPUs have no native bf16 ALUs; keep the f32 compute path there.
    return "v5" not in kind


def iou_loss(pred, gt, eps: float = 1.0, *, _block_budget_bytes=None):
    assert pred.shape == gt.shape, "pred/gt shapes must match"
    assert pred.ndim >= 2, "need at least 2 trailing spatial dims"

    lead = pred.shape[:-2]
    hw = int(pred.shape[-2]) * int(pred.shape[-1])
    n_rows = 1
    for d in lead:
        n_rows *= int(d)
    n_rows = max(n_rows, 1)

    pred2 = pred.reshape(n_rows, hw)
    gt2 = gt.reshape(n_rows, hw)

    compute_f32 = not (_use_bf16_compute(pred2.dtype) and _use_bf16_compute(gt2.dtype))

    itemsize = max(jnp.dtype(pred2.dtype).itemsize, jnp.dtype(gt2.dtype).itemsize)
    budget = _BLOCK_BUDGET_BYTES if _block_budget_bytes is None else int(_block_budget_bytes)
    row_tile, col_tile = _choose_tiles(n_rows, hw, itemsize, budget)

    n_row_tiles = _cdiv(n_rows, row_tile)
    n_col_tiles = _cdiv(hw, col_tile)
    need_row_mask = (n_rows % row_tile) != 0
    need_col_mask = (hw % col_tile) != 0

    kernel = functools.partial(
        _iou_kernel, eps=float(eps), n_rows=n_rows, hw=hw,
        row_tile=row_tile, col_tile=col_tile,
        need_row_mask=need_row_mask, need_col_mask=need_col_mask,
        compute_f32=compute_f32)

    per_row = pl.pallas_call(
        kernel,
        out_shape=jax.ShapeDtypeStruct((n_rows, 1), jnp.float32),
        grid_spec=pltpu.PrefetchScalarGridSpec(
            num_scalar_prefetch=0,
            grid=(n_row_tiles, n_col_tiles),
            in_specs=[
                pl.BlockSpec((row_tile, col_tile), lambda i, j: (i, j)),
                pl.BlockSpec((row_tile, col_tile), lambda i, j: (i, j)),
            ],
            out_specs=pl.BlockSpec((row_tile, 1), lambda i, j: (i, 0)),
            scratch_shapes=[
                pltpu.VMEM((row_tile, 1), jnp.float32),  # intersection acc
                pltpu.VMEM((row_tile, 1), jnp.float32),  # sum(pred)+sum(gt) acc
            ],
        ),
        compiler_params=pltpu.CompilerParams(
            dimension_semantics=("parallel", "arbitrary"),
            vmem_limit_bytes=_VMEM_LIMIT_BYTES,
        ),
    )(pred2, gt2)

    # Invalid/padded rows are exactly 0 in-kernel; tiny final mean here.
    return jnp.sum(per_row) / jnp.float32(n_rows)


def iou_loss_ref(pred, gt, eps: float = 1.0):
    intersection = (gt * pred).sum((-2, -1))
    union = gt.sum((-2, -1)) + pred.sum((-2, -1)) - intersection
    return jnp.mean(1.0 - (intersection + eps) / (union + eps))


if __name__ == "__main__":
    key = jax.random.PRNGKey(0)
    kp, kg = jax.random.split(key)

    # 1) Aligned NCHW case (single-tile fast path, no masking).
    shape = (2, 4, 16, 16)
    pred = jax.nn.sigmoid(jax.random.normal(kp, shape, dtype=jnp.float32))
    gt = (jax.random.uniform(kg, shape) > 0.5).astype(jnp.float32)
    out = jax.block_until_ready(iou_loss(pred, gt, eps=1.0))
    ref = iou_loss_ref(pred, gt, eps=1.0)
    assert jnp.allclose(out, ref, atol=1e-5, rtol=1e-5), (out, ref)

    # 2) Unaligned spatial dims: full-extent blocks, no pad, no mask needed.
    kp2, kg2 = jax.random.split(kg)
    shape2 = (2, 3, 15, 17)
    pred_b = jax.nn.sigmoid(jax.random.normal(kp2, shape2, dtype=jnp.float32))
    gt_b = (jax.random.uniform(kg2, shape2) > 0.5).astype(jnp.float32)
    out_b = jax.block_until_ready(iou_loss(pred_b, gt_b, eps=1.0))
    ref_b = iou_loss_ref(pred_b, gt_b, eps=1.0)
    assert jnp.allclose(out_b, ref_b, atol=1e-5, rtol=1e-5), (out_b, ref_b)

    # 3) Force a multi-tile (2,3) grid + pl.when-gated edge masking and the
    #    column-axis accumulator path by shrinking the block budget.
    kp3, kg3 = jax.random.split(kg2)
    shape3 = (2, 5, 16, 20)
    pred_c = jax.nn.sigmoid(jax.random.normal(kp3, shape3, dtype=jnp.float32))
    gt_c = (jax.random.uniform(kg3, shape3) > 0.5).astype(jnp.float32)
    out_c = jax.block_until_ready(
        iou_loss(pred_c, gt_c, eps=1.0, _block_budget_bytes=8 * 128 * 4))
    ref_c = iou_loss_ref(pred_c, gt_c, eps=1.0)
    assert jnp.allclose(out_c, ref_c, atol=1e-5, rtol=1e-5), (out_c, ref_c)

    # 4) bf16 inputs: bf16 elementwise on v6e/v7x (f32 cast path on v5e),
    #    f32 accumulation either way.  Loose tolerance vs f32 reference.
    pred_d = pred.astype(jnp.bfloat16)
    gt_d = gt.astype(jnp.bfloat16)
    out_d = jax.block_until_ready(iou_loss(pred_d, gt_d, eps=1.0))
    ref_d = iou_loss_ref(pred_d.astype(jnp.float32), gt_d.astype(jnp.float32), eps=1.0)
    assert jnp.allclose(out_d, ref_d, atol=2e-2, rtol=2e-2), (out_d, ref_d)

    print("KERNEL_OK")
</pallas_src>

<mosaic_0001>
module attributes {stable_mosaic.version = 11 : i64} {
  func.func @_iou_kernel(%arg0: i32, %arg1: i32, %arg2: memref<8x256xf32, #tpu.memory_space<vmem>>, %arg3: memref<8x256xf32, #tpu.memory_space<vmem>>, %arg4: memref<8x1xf32, #tpu.memory_space<vmem>>, %arg5: memref<8x1xf32, #tpu.memory_space<vmem>>, %arg6: memref<8x1xf32, #tpu.memory_space<vmem>>) attributes {dimension_semantics = [#tpu.dimension_semantics<parallel>, #tpu.dimension_semantics<arbitrary>], iteration_bounds = array<i64: 1, 1>, scalar_prefetch = 0 : i64, scratch_operands = 2 : i64, tpu.core_type = #tpu.core_type<tc>, window_params = [{transform_indices = @transform_0, window_bounds = array<i64: 8, 256>}, {transform_indices = @transform_1, window_bounds = array<i64: 8, 256>}, {transform_indices = @transform_2, window_bounds = array<i64: 8, 1>}]} {
    %c0_i32 = arith.constant 0 : i32
    %0 = arith.cmpi eq, %arg1, %c0_i32 : i32
    %1 = arith.extui %0 : i1 to i32
    %c0_i32_0 = arith.constant 0 : i32
    %2 = arith.cmpi ne, %1, %c0_i32_0 : i32
    scf.if %2 {
      %cst_15 = arith.constant 0.000000e+00 : f32
      %20 = vector.broadcast %cst_15 : f32 to vector<8x1xf32>
      %c0_16 = arith.constant 0 : index
      %c0_17 = arith.constant 0 : index
      %21 = vector.load %arg5[%c0_16, %c0_17] : memref<8x1xf32, #tpu.memory_space<vmem>>, vector<8x1xf32>
      tpu.vector_store %arg5[%c0_16, %c0_17], %20 {strides = array<i32>} : memref<8x1xf32, #tpu.memory_space<vmem>>, vector<8x1xf32>,
      %cst_18 = arith.constant 0.000000e+00 : f32
      %22 = vector.broadcast %cst_18 : f32 to vector<8x1xf32>
      %c0_19 = arith.constant 0 : index
      %c0_20 = arith.constant 0 : index
      %23 = vector.load %arg6[%c0_19, %c0_20] : memref<8x1xf32, #tpu.memory_space<vmem>>, vector<8x1xf32>
      tpu.vector_store %arg6[%c0_19, %c0_20], %22 {strides = array<i32>} : memref<8x1xf32, #tpu.memory_space<vmem>>, vector<8x1xf32>,
    } else {
    }
    %c0 = arith.constant 0 : index
    %c0_1 = arith.constant 0 : index
    %3 = vector.load %arg2[%c0, %c0_1] : memref<8x256xf32, #tpu.memory_space<vmem>>, vector<8x256xf32>
    %c0_2 = arith.constant 0 : index
    %c0_3 = arith.constant 0 : index
    %4 = vector.load %arg3[%c0_2, %c0_3] : memref<8x256xf32, #tpu.memory_space<vmem>>, vector<8x256xf32>
    %c0_4 = arith.constant 0 : index
    %c0_5 = arith.constant 0 : index
    %5 = vector.load %arg5[%c0_4, %c0_5] : memref<8x1xf32, #tpu.memory_space<vmem>>, vector<8x1xf32>
    %6 = arith.mulf %3, %4 : vector<8x256xf32>
    %cst = arith.constant dense<0.000000e+00> : vector<8xf32>
    %7 = vector.multi_reduction <add>, %6, %cst [1] : vector<8x256xf32> to vector<8xf32>
    %8 = vector.shape_cast %7 : vector<8xf32> to vector<8x1xf32>
    %9 = arith.addf %5, %8 : vector<8x1xf32>
    %c0_6 = arith.constant 0 : index
    %c0_7 = arith.constant 0 : index
    %10 = vector.load %arg5[%c0_6, %c0_7] : memref<8x1xf32, #tpu.memory_space<vmem>>, vector<8x1xf32>
    tpu.vector_store %arg5[%c0_6, %c0_7], %9 {strides = array<i32>} : memref<8x1xf32, #tpu.memory_space<vmem>>, vector<8x1xf32>,
    %c0_8 = arith.constant 0 : index
    %c0_9 = arith.constant 0 : index
    %11 = vector.load %arg6[%c0_8, %c0_9] : memref<8x1xf32, #tpu.memory_space<vmem>>, vector<8x1xf32>
    %12 = arith.addf %3, %4 : vector<8x256xf32>
    %cst_10 = arith.constant dense<0.000000e+00> : vector<8xf32>
    %13 = vector.multi_reduction <add>, %12, %cst_10 [1] : vector<8x256xf32> to vector<8xf32>
    %14 = vector.shape_cast %13 : vector<8xf32> to vector<8x1xf32>
    %15 = arith.addf %11, %14 : vector<8x1xf32>
    %c0_11 = arith.constant 0 : index
    %c0_12 = arith.constant 0 : index
    %16 = vector.load %arg6[%c0_11, %c0_12] : memref<8x1xf32, #tpu.memory_space<vmem>>, vector<8x1xf32>
    tpu.vector_store %arg6[%c0_11, %c0_12], %15 {strides = array<i32>} : memref<8x1xf32, #tpu.memory_space<vmem>>, vector<8x1xf32>,
    %c0_i32_13 = arith.constant 0 : i32
    %17 = arith.cmpi eq, %arg1, %c0_i32_13 : i32
    %18 = arith.extui %17 : i1 to i32
    %c0_i32_14 = arith.constant 0 : i32
    %19 = arith.cmpi ne, %18, %c0_i32_14 : i32
    scf.if %19 {
      %c0_15 = arith.constant 0 : index
      %c0_16 = arith.constant 0 : index
      %20 = vector.load %arg5[%c0_15, %c0_16] : memref<8x1xf32, #tpu.memory_space<vmem>>, vector<8x1xf32>
      %c0_17 = arith.constant 0 : index
      %c0_18 = arith.constant 0 : index
      %21 = vector.load %arg6[%c0_17, %c0_18] : memref<8x1xf32, #tpu.memory_space<vmem>>, vector<8x1xf32>
      %22 = arith.subf %21, %20 : vector<8x1xf32>
      %cst_19 = arith.constant 1.000000e+00 : f32
      %23 = vector.broadcast %cst_19 : f32 to vector<8x1xf32>
      %24 = arith.addf %20, %23 : vector<8x1xf32>
      %cst_20 = arith.constant 1.000000e+00 : f32
      %25 = vector.broadcast %cst_20 : f32 to vector<8x1xf32>
      %26 = arith.addf %22, %25 : vector<8x1xf32>
      %27 = arith.divf %24, %26 : vector<8x1xf32>
      %cst_21 = arith.constant 1.000000e+00 : f32
      %28 = vector.broadcast %cst_21 : f32 to vector<8x1xf32>
      %29 = arith.subf %28, %27 : vector<8x1xf32>
      %c0_22 = arith.constant 0 : index
      %c0_23 = arith.constant 0 : index
      %30 = vector.load %arg4[%c0_22, %c0_23] : memref<8x1xf32, #tpu.memory_space<vmem>>, vector<8x1xf32>
      tpu.vector_store %arg4[%c0_22, %c0_23], %29 {strides = array<i32>} : memref<8x1xf32, #tpu.memory_space<vmem>>, vector<8x1xf32>,
    } else {
    }
    return
  }
  func.func @transform_0(%arg0: i32, %arg1: i32) -> (i32, i32) {
    %c0_i32 = arith.constant 0 : i32
    return %arg0, %arg1 : i32, i32
  }
  func.func @transform_1(%arg0: i32, %arg1: i32) -> (i32, i32) {
    %c0_i32 = arith.constant 0 : i32
    return %arg0, %arg1 : i32, i32
  }
  func.func @transform_2(%arg0: i32, %arg1: i32) -> (i32, i32) {
    %c0_i32 = arith.constant 0 : i32
    %c0_i32_0 = arith.constant 0 : i32
    return %arg0, %c0_i32 : i32, i32
  }
}

</mosaic_0001>

<llo_original>
// kernel: tpu_custom_call.1
$region0: #{tpu_custom_call.1}
  #allocation0 [shape = 'u32[]', space=smem, size = 0x4, offset = 0x4, fixed_abs, tag = 'smem constant byte address 0x4 - core index']
  #allocation1 [shape = 'u32[144,128]{1,0:T(1,128)}', space=vmem, size = 0x12000, scoped, tag = 'internal scratch']
  #allocation2 [shape = 'f32[8,1]{1,0:T(8,128)}', space=vmem, size = 0x1000, scoped, tag = 'scratch operand']
  #allocation3 [shape = 'f32[8,1]{1,0:T(8,128)}', space=vmem, size = 0x1000, scoped, tag = 'scratch operand']
  %s0 = inlined_call_operand.hbm [shape: f32[8,256], index: 0, kind: input, shape index: {}]
  %s1 = inlined_call_operand.hbm [shape: f32[8,256], index: 1, kind: input, shape index: {}]
  %s2 = inlined_call_operand.vmem [shape: f32[8,1], index: 2, kind: output, shape index: {}]
  %s3 = sld [smem:[#allocation0]]
  $region34: #{tpu_custom_call.1} parent=0
    _
  %s5 = ssub.s32 1, %s3
  %s6 = scalar_select 0, %s5, %s3
  $region1: #{tpu_custom_call.1} parent=0
    #allocation4 [shape = 'u8[8192]{0}', space=vmem, size = 0x2000, scoped, tag = 'input window, operand 0, single buffered']
    #allocation5 [shape = 's32[1]{0}', space=sflag, size = 0x4, scoped, tag = 'scoped memory for tpu_custom_call.1']
    #allocation6 [shape = 'u8[8192]{0}', space=vmem, size = 0x2000, scoped, tag = 'input window, operand 1, single buffered']
    #allocation7 [shape = 's32[1]{0}', space=sflag, size = 0x4, scoped, tag = 'scoped memory for tpu_custom_call.1']
    %7 = vsyncpa [#allocation5], 0
    %8 = vsyncpa [#allocation7], 0
    // Predicated region
    $region2: #{tpu_custom_call.1} parent=1 // pred_check
      _
    $region3: #{tpu_custom_call.1} parent=1 // pred_check_branch
      %10 = sbr.rel (0) target = $region5
    $region4: #{tpu_custom_call.1} parent=1 // pred_region
      %s12 = ssub.s32 256, 256
      %13 = vsyncadd [#allocation5], %s12
      %s15 = sshll.u32 [#allocation4], 4
      %s16 = int_to_ptr.vmem [resolvable:$true] %s15
      %18 = dma.hbm_to_vmem [thread:$0]  %s0, 256, %s16, [#allocation5]
    $region5: #{tpu_custom_call.1} parent=1 // pred_fallthru
      _
    // Predicated region
    $region6: #{tpu_custom_call.1} parent=1 // pred_check
      _
    $region7: #{tpu_custom_call.1} parent=1 // pred_check_branch
      %20 = sbr.rel (0) target = $region9
    $region8: #{tpu_custom_call.1} parent=1 // pred_region
      %s22 = ssub.s32 256, 256
      %23 = vsyncadd [#allocation7], %s22
      %s25 = sshll.u32 [#allocation6], 4
      %s26 = int_to_ptr.vmem [resolvable:$true] %s25
      %28 = dma.hbm_to_vmem [thread:$0]  %s1, 256, %s26, [#allocation7]
    $region9: #{tpu_custom_call.1} parent=1 // pred_fallthru
      _
    // Predicated region
    $region10: #{tpu_custom_call.1} parent=1 // pred_check
      _
    $region11: #{tpu_custom_call.1} parent=1 // pred_check_branch
      %30 = sbr.rel (0) target = $region13
    $region12: #{tpu_custom_call.1} parent=1 // pred_region
      %31 = dma.done [#allocation5], 256
    $region13: #{tpu_custom_call.1} parent=1 // pred_fallthru
      _
    // Predicated region
    $region14: #{tpu_custom_call.1} parent=1 // pred_check
      _
    $region15: #{tpu_custom_call.1} parent=1 // pred_check_branch
      %33 = sbr.rel (0) target = $region17
    $region16: #{tpu_custom_call.1} parent=1 // pred_region
      %34 = dma.done [#allocation7], 256
    $region17: #{tpu_custom_call.1} parent=1 // pred_fallthru
      _
    %p35 = scmp.eq.s32.totalorder 0, 0
    // Predicated region
    $region18: #{tpu_custom_call.1} parent=1 // pred_check
      %p36 = pneg %p35
    $region19: #{tpu_custom_call.1} parent=1 // pred_check_branch
      %38 = sbr.rel (%p36) target = $region21
    $region20: #{tpu_custom_call.1} parent=1 // pred_region
      %vm39 = vcmask 7168
      %40 = vst.msk [vmem:[#allocation2] sm:$0xff] %vm39, 0.0
      %41 = vst.msk [vmem:[#allocation3] sm:$0xff] %vm39, 0.0
    $region21: #{tpu_custom_call.1} parent=1 // pred_fallthru
      _
    %v42 = vld [vmem:[#allocation4] sm:$0xff]
    %v43 = vld [vmem:[#allocation4 + $0x8] sm:$0xff]
    %v44 = vld [vmem:[#allocation6] sm:$0xff]
    %v45 = vld [vmem:[#allocation6 + $0x8] sm:$0xff]
    %v46 = vld [vmem:[#allocation2] sm:$0xff]
    %v47 = vmul.f32 %v42, %v44
    %v48 = vmul.f32 %v43, %v45
    %v49 = vadd.f32 %v47, %v48
    %50 = vadd.xlane.f32.xlu0 %v49
    %v51 = vpop.xlane.xlu0 %50
    %v52 = vadd.f32 %v46, %v51
    %vm53 = vcmask 7168
    %54 = vst.msk [vmem:[#allocation2] sm:$0xff] %vm53, %v52
    %v55 = vld [vmem:[#allocation3] sm:$0xff]
    %v56 = vadd.f32 %v42, %v44
    %v57 = vadd.f32 %v43, %v45
    %v58 = vadd.f32 %v56, %v57
    %59 = vadd.xlane.f32.xlu0 %v58
    %v60 = vpop.xlane.xlu0 %59
    %v61 = vadd.f32 %v55, %v60
    %62 = vst.msk [vmem:[#allocation3] sm:$0xff] %vm53, %v61
    // Predicated region
    $region22: #{tpu_custom_call.1} parent=1 // pred_check
      %p63 = pneg %p35
    $region23: #{tpu_custom_call.1} parent=1 // pred_check_branch
      %65 = sbr.rel (%p63) target = $region25
    $region24: #{tpu_custom_call.1} parent=1 // pred_region
      %v66 = vld [vmem:[#allocation2] sm:$0xff]
      %v67 = vld [vmem:[#allocation3] sm:$0xff]
      %v68 = vsub.f32 %v67, %v66
      %v69 = vadd.f32 %v66, 1.0
      %v70 = vadd.f32 %v68, 1.0
      %v71 = vrcp.pop %v70
      %v72 = vmul.f32 %v69, %v71
      %v73 = vsub.f32 1.0, %v72
      %74 = vst.msk [vmem:[%s2] sm:$0xff] %vm53, %v73
    $region25: #{tpu_custom_call.1} parent=1 // pred_fallthru
      _
    // Predicated region
    $region26: #{tpu_custom_call.1} parent=1 // pred_check
      _
    $region27: #{tpu_custom_call.1} parent=1 // pred_check_branch
      %76 = sbr.rel (0) target = $region29
    $region28: #{tpu_custom_call.1} parent=1 // pred_region
      _
    $region29: #{tpu_custom_call.1} parent=1 // pred_fallthru
      _
    // Predicated region
    $region30: #{tpu_custom_call.1} parent=1 // pred_check
      _
    $region31: #{tpu_custom_call.1} parent=1 // pred_check_branch
      %78 = sbr.rel (0) target = $region33
    $region32: #{tpu_custom_call.1} parent=1 // pred_region
      _
    $region33: #{tpu_custom_call.1} parent=1 // pred_fallthru
      _
    %79 = vsyncpa [#allocation5], 1
    %80 = vsyncpa [#allocation7], 1

</llo_original>
